<compile_context>
chip_gen: v6e
topology: v6e:2x2x1
jax: 0.10.0
libtpu: 0.0.40
codegen_flags: <defaults>
</compile_context>

<pallas_src>
import jax
import jax.numpy as jnp
import numpy as np
from jax.experimental import pallas as pl
from jax.experimental.pallas import tpu as pltpu

NUM_EMBED = 60  # nn.Embedding(60, num_pos_feats)


def _m_emb_kernel(slab_ref, m_ref):
    # slab_ref: (2F, H*W)       batch-invariant channel-first slab (resident input)
    # m_ref   : (Bt, 2F, H*W)   output block for the current batch tile
    slab = slab_ref[...]
    # Short static unrolled loop: one dense (2F, H*W) store per batch element keeps
    # live vreg pressure at a single slab instead of Bt slabs.
    for bt in range(m_ref.shape[0]):
        m_ref[bt] = slab


def position_embedding_learned_with_pose_token(x, row_w, col_w, pose_w):
    """x: (B, C, H, W), NCHW like the PyTorch module. Returns (p_emb, m_emb)."""
    B = int(x.shape[0])
    H, W = int(x.shape[-2]), int(x.shape[-1])
    F = int(row_w.shape[1])
    out_dtype = row_w.dtype  # kernel preserves embedding dtype

    # nn.Embedding range check (indices are 1..W / 1..H).
    if W + 1 > col_w.shape[0] or H + 1 > row_w.shape[0]:
        raise ValueError(f"H={H}, W={W} exceed embedding table size {col_w.shape[0]} - 1")

    # --- One-time slab construction in XLA (tiny vs. the B-times-replicated output). ---
    i = jnp.arange(W) + 1
    j = jnp.arange(H) + 1
    x_emb = col_w[i]                                              # (W, F)
    y_emb = row_w[j]                                              # (H, F)
    # channel-first: channels [0, F) depend only on w; channels [F, 2F) only on h.
    x_part = jnp.broadcast_to(x_emb.T[:, None, :], (F, H, W)).reshape(F, H * W)
    y_part = jnp.broadcast_to(y_emb.T[:, :, None], (F, H, W)).reshape(F, H * W)
    slab = jnp.concatenate([x_part, y_part], axis=0).astype(out_dtype)  # (2F, H*W)

    # --- Pick Bt (batch elements per grid step). ---------------------------------------
    # VMEM per step ~ 2 * Bt * slab_bytes (double-buffered output) + slab_bytes (resident
    # input, counted twice for safety).  Keep it under ~24 MiB so the 32 MiB scoped
    # default works on every chip, including v7x (64 MiB physical VMEM).
    slab_bytes = 2 * F * H * W * jnp.dtype(out_dtype).itemsize
    vmem_budget = 24 * 1024 * 1024
    max_bt = int(max(1, vmem_budget // (2 * slab_bytes) - 1))
    max_bt = min(max_bt, 16, B)
    Bt = 1
    for cand in range(max_bt, 0, -1):
        if B % cand == 0:                                         # exact tiling of batch
            Bt = cand
            break

    m_flat = pl.pallas_call(
        _m_emb_kernel,
        grid=(B // Bt,),
        in_specs=[
            pl.BlockSpec((2 * F, H * W), lambda b: (0, 0)),       # resident, fetched once
        ],
        out_specs=pl.BlockSpec((Bt, 2 * F, H * W), lambda b: (b, 0, 0)),
        out_shape=jax.ShapeDtypeStruct((B, 2 * F, H * W), out_dtype),
        compiler_params=pltpu.CompilerParams(
            dimension_semantics=("parallel",),                    # batch tiles over 2 TCs on v7x
            vmem_limit_bytes=32 * 1024 * 1024,                    # modest; safe on 64 MiB v7x
        ),
    )(slab)

    # Free reshape (no data movement): (B, 2F, H*W) -> (B, 2F, H, W)
    m_emb = m_flat.reshape(B, 2 * F, H, W)

    # p_emb: (B, 2F) pose-token broadcast (p = i[0]-1 = 0) — a few hundred bytes, plain XLA.
    p_row = pose_w[0]                                             # (F,)
    p_emb = jnp.tile(jnp.concatenate([p_row, p_row])[None, :], (B, 1))
    return p_emb, m_emb


def _reference(x, row_w, col_w, pose_w):
    """Pure-JAX mirror of the PyTorch forward, for verification."""
    B = x.shape[0]
    H, W = x.shape[-2], x.shape[-1]
    F = row_w.shape[1]
    i = jnp.arange(W) + 1
    j = jnp.arange(H) + 1
    x_emb = col_w[i]                                              # (W, F)
    y_emb = row_w[j]                                              # (H, F)
    p_row = pose_w[0]                                             # (F,)
    p_emb = jnp.tile(jnp.concatenate([p_row, p_row])[None, :], (B, 1))
    m = jnp.concatenate(
        [jnp.broadcast_to(x_emb[None, :, :], (H, W, F)),
         jnp.broadcast_to(y_emb[:, None, :], (H, W, F))], axis=-1)
    m_emb = jnp.broadcast_to(jnp.transpose(m, (2, 0, 1))[None], (B, 2 * F, H, W))
    return p_emb, m_emb


if __name__ == "__main__":
    key = jax.random.PRNGKey(0)
    k1, k2, k3, k4 = jax.random.split(key, 4)

    num_pos_feats = 32
    B, C, H, W = 2, 4, 16, 16

    # nn.init.uniform_ -> U[0, 1); deterministic synthetic params (no checkpoint load)
    row_w = jax.random.uniform(k1, (NUM_EMBED, num_pos_feats), dtype=jnp.float32)
    col_w = jax.random.uniform(k2, (NUM_EMBED, num_pos_feats), dtype=jnp.float32)
    pose_w = jax.random.uniform(k3, (NUM_EMBED, num_pos_feats), dtype=jnp.float32)
    x = jax.random.normal(k4, (B, C, H, W), dtype=jnp.float32)

    p_emb, m_emb = position_embedding_learned_with_pose_token(x, row_w, col_w, pose_w)
    jax.block_until_ready((p_emb, m_emb))

    p_ref, m_ref = _reference(x, row_w, col_w, pose_w)
    assert p_emb.shape == (B, 2 * num_pos_feats)
    assert m_emb.shape == (B, 2 * num_pos_feats, H, W)
    np.testing.assert_array_equal(np.asarray(p_emb), np.asarray(p_ref))
    np.testing.assert_array_equal(np.asarray(m_emb), np.asarray(m_ref))

    print("KERNEL_OK")
</pallas_src>

<mosaic_0001>
module attributes {stable_mosaic.version = 11 : i64} {
  func.func @_m_emb_kernel(%arg0: i32, %arg1: memref<64x256xf32, #tpu.memory_space<vmem>>, %arg2: memref<2x64x256xf32, #tpu.memory_space<vmem>>) attributes {dimension_semantics = [#tpu.dimension_semantics<parallel>], iteration_bounds = array<i64: 1>, scalar_prefetch = 0 : i64, scratch_operands = 0 : i64, tpu.core_type = #tpu.core_type<tc>, window_params = [{pipeline_mode = #tpu.pipeline_mode<synchronous>, transform_indices = @transform_0, window_bounds = array<i64: 64, 256>}, {transform_indices = @transform_1, window_bounds = array<i64: 2, 64, 256>}]} {
    %c0 = arith.constant 0 : index
    %c0_0 = arith.constant 0 : index
    %0 = vector.load %arg1[%c0, %c0_0] : memref<64x256xf32, #tpu.memory_space<vmem>>, vector<64x256xf32>
    %c0_1 = arith.constant 0 : index
    %c0_2 = arith.constant 0 : index
    %c0_3 = arith.constant 0 : index
    %1 = vector.load %arg2[%c0_1, %c0_2, %c0_3] : memref<2x64x256xf32, #tpu.memory_space<vmem>>, vector<1x64x256xf32>
    %2 = vector.shape_cast %1 : vector<1x64x256xf32> to vector<64x256xf32>
    %3 = vector.shape_cast %0 : vector<64x256xf32> to vector<1x64x256xf32>
    tpu.vector_store %arg2[%c0_1, %c0_2, %c0_3], %3 {strides = array<i32>} : memref<2x64x256xf32, #tpu.memory_space<vmem>>, vector<1x64x256xf32>,
    %c1 = arith.constant 1 : index
    %c0_4 = arith.constant 0 : index
    %c0_5 = arith.constant 0 : index
    %4 = vector.load %arg2[%c1, %c0_4, %c0_5] : memref<2x64x256xf32, #tpu.memory_space<vmem>>, vector<1x64x256xf32>
    %5 = vector.shape_cast %4 : vector<1x64x256xf32> to vector<64x256xf32>
    %6 = vector.shape_cast %0 : vector<64x256xf32> to vector<1x64x256xf32>
    tpu.vector_store %arg2[%c1, %c0_4, %c0_5], %6 {strides = array<i32>} : memref<2x64x256xf32, #tpu.memory_space<vmem>>, vector<1x64x256xf32>,
    return
  }
  func.func @transform_0(%arg0: i32) -> (i32, i32) {
    %c0_i32 = arith.constant 0 : i32
    %c0_i32_0 = arith.constant 0 : i32
    %c0_i32_1 = arith.constant 0 : i32
    return %c0_i32, %c0_i32_0 : i32, i32
  }
  func.func @transform_1(%arg0: i32) -> (i32, i32, i32) {
    %c0_i32 = arith.constant 0 : i32
    %c0_i32_0 = arith.constant 0 : i32
    %c0_i32_1 = arith.constant 0 : i32
    return %arg0, %c0_i32, %c0_i32_0 : i32, i32, i32
  }
}

</mosaic_0001>

<llo_original>
// kernel: tpu_custom_call.1
$region0: #{tpu_custom_call.1}
  #allocation0 [shape = 'u32[]', space=smem, size = 0x4, offset = 0x4, fixed_abs, tag = 'smem constant byte address 0x4 - core index']
  #allocation1 [shape = 'u32[144,128]{1,0:T(1,128)}', space=vmem, size = 0x12000, scoped, tag = 'internal scratch']
  %s0 = inlined_call_operand.hbm [shape: f32[64,256], index: 0, kind: input, shape index: {}]
  %s1 = inlined_call_operand.hbm [shape: f32[2,64,256], index: 1, kind: output, shape index: {}]
  %s2 = sld [smem:[#allocation0]]
  $region18: #{tpu_custom_call.1} parent=0
    _
  %s4 = ssub.s32 1, %s2
  %s5 = scalar_select 0, %s4, %s2
  $region1: #{tpu_custom_call.1} parent=0
    #allocation2 [shape = 'u8[65536]{0}', space=vmem, size = 0x10000, scoped, tag = 'input window, operand 0, single buffered']
    #allocation3 [shape = 's32[1]{0}', space=sflag, size = 0x4, scoped, tag = 'scoped memory for tpu_custom_call.1']
    #allocation4 [shape = 's32[1]{0}', space=sflag, size = 0x4, scoped, tag = 'scoped memory for tpu_custom_call.1']
    #allocation5 [shape = 'u8[131072]{0}', space=vmem, size = 0x20000, scoped, tag = 'output window, operand 0, single buffered']
    %6 = vsyncpa [#allocation3], 0
    %7 = vsyncpa [#allocation4], 0
    // Predicated region
    $region2: #{tpu_custom_call.1} parent=1 // pred_check
      _
    $region3: #{tpu_custom_call.1} parent=1 // pred_check_branch
      %9 = sbr.rel (0) target = $region5
    $region4: #{tpu_custom_call.1} parent=1 // pred_region
      %s11 = ssub.s32 2048, 2048
      %12 = vsyncadd [#allocation3], %s11
      %s13 = sshll.u32 [#allocation2], 4
      %s14 = int_to_ptr.vmem [resolvable:$true] %s13
      %19 = dma.hbm_to_vmem [thread:$0]  %s0, 2048, %s14, [#allocation3], 256, 256, 16
    $region5: #{tpu_custom_call.1} parent=1 // pred_fallthru
      _
    // Predicated region
    $region6: #{tpu_custom_call.1} parent=1 // pred_check
      _
    $region7: #{tpu_custom_call.1} parent=1 // pred_check_branch
      %21 = sbr.rel (0) target = $region9
    $region8: #{tpu_custom_call.1} parent=1 // pred_region
      %22 = dma.done [#allocation3], 2048
    $region9: #{tpu_custom_call.1} parent=1 // pred_fallthru
      _
    %v23 = vld [vmem:[#allocation2] sm:$0xff]
    %v24 = vld [vmem:[#allocation2 + $0x8] sm:$0xff]
    %v25 = vld [vmem:[#allocation2 + $0x10] sm:$0xff]
    %v26 = vld [vmem:[#allocation2 + $0x18] sm:$0xff]
    %v27 = vld [vmem:[#allocation2 + $0x20] sm:$0xff]
    %v28 = vld [vmem:[#allocation2 + $0x28] sm:$0xff]
    %v29 = vld [vmem:[#allocation2 + $0x30] sm:$0xff]
    %v30 = vld [vmem:[#allocation2 + $0x38] sm:$0xff]
    %v31 = vld [vmem:[#allocation2 + $0x40] sm:$0xff]
    %v32 = vld [vmem:[#allocation2 + $0x48] sm:$0xff]
    %v33 = vld [vmem:[#allocation2 + $0x50] sm:$0xff]
    %v34 = vld [vmem:[#allocation2 + $0x58] sm:$0xff]
    %v35 = vld [vmem:[#allocation2 + $0x60] sm:$0xff]
    %v36 = vld [vmem:[#allocation2 + $0x68] sm:$0xff]
    %v37 = vld [vmem:[#allocation2 + $0x70] sm:$0xff]
    %v38 = vld [vmem:[#allocation2 + $0x78] sm:$0xff]
    %39 = vst [vmem:[#allocation5] sm:$0xff] %v23
    %40 = vst [vmem:[#allocation5 + $0x8] sm:$0xff] %v24
    %41 = vst [vmem:[#allocation5 + $0x10] sm:$0xff] %v25
    %42 = vst [vmem:[#allocation5 + $0x18] sm:$0xff] %v26
    %43 = vst [vmem:[#allocation5 + $0x20] sm:$0xff] %v27
    %44 = vst [vmem:[#allocation5 + $0x28] sm:$0xff] %v28
    %45 = vst [vmem:[#allocation5 + $0x30] sm:$0xff] %v29
    %46 = vst [vmem:[#allocation5 + $0x38] sm:$0xff] %v30
    %47 = vst [vmem:[#allocation5 + $0x40] sm:$0xff] %v31
    %48 = vst [vmem:[#allocation5 + $0x48] sm:$0xff] %v32
    %49 = vst [vmem:[#allocation5 + $0x50] sm:$0xff] %v33
    %50 = vst [vmem:[#allocation5 + $0x58] sm:$0xff] %v34
    %51 = vst [vmem:[#allocation5 + $0x60] sm:$0xff] %v35
    %52 = vst [vmem:[#allocation5 + $0x68] sm:$0xff] %v36
    %53 = vst [vmem:[#allocation5 + $0x70] sm:$0xff] %v37
    %54 = vst [vmem:[#allocation5 + $0x78] sm:$0xff] %v38
    %s55 = scalar_lea.vmem [#allocation5], 128
    %56 = vst [vmem:[%s55] sm:$0xff] %v23
    %57 = vst [vmem:[%s55 + $0x8] sm:$0xff] %v24
    %58 = vst [vmem:[%s55 + $0x10] sm:$0xff] %v25
    %59 = vst [vmem:[%s55 + $0x18] sm:$0xff] %v26
    %60 = vst [vmem:[%s55 + $0x20] sm:$0xff] %v27
    %61 = vst [vmem:[%s55 + $0x28] sm:$0xff] %v28
    %62 = vst [vmem:[%s55 + $0x30] sm:$0xff] %v29
    %63 = vst [vmem:[%s55 + $0x38] sm:$0xff] %v30
    %64 = vst [vmem:[%s55 + $0x40] sm:$0xff] %v31
    %65 = vst [vmem:[%s55 + $0x48] sm:$0xff] %v32
    %66 = vst [vmem:[%s55 + $0x50] sm:$0xff] %v33
    %67 = vst [vmem:[%s55 + $0x58] sm:$0xff] %v34
    %68 = vst [vmem:[%s55 + $0x60] sm:$0xff] %v35
    %69 = vst [vmem:[%s55 + $0x68] sm:$0xff] %v36
    %70 = vst [vmem:[%s55 + $0x70] sm:$0xff] %v37
    %71 = vst [vmem:[%s55 + $0x78] sm:$0xff] %v38
    // Predicated region
    $region10: #{tpu_custom_call.1} parent=1 // pred_check
      _
    $region11: #{tpu_custom_call.1} parent=1 // pred_check_branch
      %73 = sbr.rel (0) target = $region13
    $region12: #{tpu_custom_call.1} parent=1 // pred_region
      %s75 = ssub.s32 4096, 4096
      %76 = vsyncadd [#allocation4], %s75
      %s77 = sshll.u32 [#allocation5], 4
      %s78 = int_to_ptr.vmem [resolvable:$true] %s77
      %83 = dma.vmem_to_hbm [thread:$0]  %s78, 4096, %s1, [#allocation4], 256, 256, 16
    $region13: #{tpu_custom_call.1} parent=1 // pred_fallthru
      _
    // Predicated region
    $region14: #{tpu_custom_call.1} parent=1 // pred_check
      _
    $region15: #{tpu_custom_call.1} parent=1 // pred_check_branch
      %85 = sbr.rel (0) target = $region17
    $region16: #{tpu_custom_call.1} parent=1 // pred_region
      %86 = dma.done [#allocation4], 4096
    $region17: #{tpu_custom_call.1} parent=1 // pred_fallthru
      _
    %87 = vsyncpa [#allocation3], 1
    %88 = vsyncpa [#allocation4], 1

</llo_original>
